<compile_context>
chip_gen: v5e
topology: v5e:2x2
jax: 0.10.0
libtpu: 0.0.40
codegen_flags: <defaults>
</compile_context>

<pallas_src>
import functools

import jax
import jax.numpy as jnp
from jax import lax
from jax.experimental import pallas as pl
from jax.experimental.pallas import tpu as pltpu


def _int_pow(x, n):
    """x ** n for a static positive integer n via repeated squaring (VALU only)."""
    result = None
    base = x
    while n > 0:
        if n & 1:
            result = base if result is None else result * base
        n >>= 1
        if n:
            base = base * base
    return result


def _distill_kernel(student_ref, teacher_ref, target_ref, out_ref, *,
                    temperature, int_temp_exp):
    s = student_ref[...].astype(jnp.float32)   # [tm, V]  (cast bf16 -> f32 on load)
    t = teacher_ref[...].astype(jnp.float32)   # [tm, V]
    tgt = target_ref[...]                      # [tm, 1] int32

    inv_t = 1.0 / temperature
    s_s = s * inv_t
    t_s = t * inv_t

    # log-softmax of temperature-scaled student logits
    s_max = jnp.max(s_s, axis=-1, keepdims=True)             # [tm, 1]
    e = jnp.exp(s_s - s_max)                                  # [tm, V]
    s_sum = jnp.sum(e, axis=-1, keepdims=True)                # [tm, 1]
    log_ps = (s_s - s_max) - jnp.log(s_sum)                   # [tm, V]

    # softmax / log-softmax of temperature-scaled teacher logits
    t_max = jnp.max(t_s, axis=-1, keepdims=True)
    t_exp = jnp.exp(t_s - t_max)
    t_sum = jnp.sum(t_exp, axis=-1, keepdims=True)
    inv_tsum = 1.0 / t_sum                 # narrow [tm,1] exact divide
    p_t = t_exp * inv_tsum                 # wide multiply instead of wide divide
    log_pt = (t_s - t_max) - jnp.log(t_sum)

    # KL(teacher || student), summed over vocab, per row
    kl_rows = jnp.sum(p_t * (log_pt - log_ps), axis=-1, keepdims=True)  # [tm, 1]

    # cross entropy on raw (unscaled) student logits with ignore_index = -100
    r_max = s_max * temperature            # max() is positive-homogeneous for T > 0
    if int_temp_exp is not None:
        # exp(s - r_max) == exp(s_s - s_max) ** T : repeated squaring on the VALU
        # instead of a third full-width exp pass on the single EUP.
        r_exp = _int_pow(e, int_temp_exp)
    else:
        r_exp = jnp.exp(s - r_max)
    r_lse = jnp.log(jnp.sum(r_exp, axis=-1, keepdims=True)) + r_max     # [tm, 1]

    vocab_ids = lax.broadcasted_iota(jnp.int32, s.shape, 1)
    picked = jnp.sum(jnp.where(vocab_ids == tgt, s, 0.0),
                     axis=-1, keepdims=True)                            # [tm, 1]
    valid = (tgt != -100).astype(jnp.float32)                           # [tm, 1]
    ce_rows = (r_lse - picked) * valid                                  # [tm, 1]

    kl_part = jnp.sum(kl_rows)
    ce_part = jnp.sum(ce_rows)
    cnt_part = jnp.sum(valid)

    # lane-dense per-tile partials: full (8,128) block, row 0 lanes 0/1/2.
    lane = lax.broadcasted_iota(jnp.int32, (8, 128), 1)
    sub = lax.broadcasted_iota(jnp.int32, (8, 128), 0)
    row0 = sub == 0
    packed = jnp.where(row0 & (lane == 0), kl_part,
             jnp.where(row0 & (lane == 1), ce_part,
             jnp.where(row0 & (lane == 2), cnt_part, 0.0)))
    out_ref[0] = packed


def _round_up(x, m):
    return ((x + m - 1) // m) * m


def _vmem_limit_bytes():
    """Scoped-VMEM limit with headroom (v7x has only 64 MiB physical VMEM)."""
    cap = None
    try:
        info = pltpu.get_tpu_info()
        cap = getattr(info, "vmem_capacity_bytes", None)
    except Exception:
        cap = None
    if not cap:
        cap = 64 * 1024 * 1024                    # conservative (v7x) fallback
    return int(cap) * 3 // 4                      # leave headroom


def _pick_row_tile(n_rows, vocab, in_itemsize, tile_budget_bytes):
    # 2 logit inputs x 2 pipeline buffers in the storage dtype, plus roughly
    # 8 live full-width f32 temporaries inside the kernel body.
    bytes_per_row = 4 * vocab * in_itemsize + 8 * vocab * 4
    tm = tile_budget_bytes // max(bytes_per_row, 1)
    tm = min(int(tm), 1024, _round_up(n_rows, 16))
    tm = (tm // 16) * 16                          # bf16-safe sublane multiple
    return max(tm, 16)


def distillation_loss(student_logits, teacher_logits, targets,
                      temperature=4.0, alpha=0.7, beta=0.3,
                      row_tile=None, vmem_limit_bytes=None):
    """Pallas implementation of DistillationLoss.forward (kl_div + hard targets)."""
    B, S, V = student_logits.shape
    N = B * S

    s2 = student_logits.reshape(N, V)
    t2 = teacher_logits.reshape(N, V)
    tgt2 = targets.reshape(N, 1).astype(jnp.int32)

    if vmem_limit_bytes is None:
        vmem_limit_bytes = _vmem_limit_bytes()
    if row_tile is None:
        row_tile = _pick_row_tile(N, V, s2.dtype.itemsize,
                                  int(vmem_limit_bytes) * 9 // 10)

    # Pad rows to a tile multiple. Zero logits (student == teacher) contribute
    # exactly 0 to the KL sum; ignore_index targets contribute 0 to CE / count.
    n_pad = _round_up(N, row_tile)
    if n_pad != N:
        pad = n_pad - N
        s2 = jnp.pad(s2, ((0, pad), (0, 0)))
        t2 = jnp.pad(t2, ((0, pad), (0, 0)))
        tgt2 = jnp.pad(tgt2, ((0, pad), (0, 0)), constant_values=-100)
    num_tiles = n_pad // row_tile

    t_f = float(temperature)
    int_temp_exp = int(t_f) if (t_f.is_integer() and 1.0 <= t_f <= 64.0) else None
    kernel = functools.partial(_distill_kernel, temperature=t_f,
                               int_temp_exp=int_temp_exp)

    partials = pl.pallas_call(
        kernel,
        out_shape=jax.ShapeDtypeStruct((num_tiles, 8, 128), jnp.float32),
        grid_spec=pltpu.PrefetchScalarGridSpec(
            num_scalar_prefetch=0,
            grid=(num_tiles,),
            in_specs=[
                pl.BlockSpec((row_tile, V), lambda i: (i, 0)),
                pl.BlockSpec((row_tile, V), lambda i: (i, 0)),
                pl.BlockSpec((row_tile, 1), lambda i: (i, 0)),
            ],
            out_specs=pl.BlockSpec((1, 8, 128), lambda i: (i, 0, 0)),
        ),
        compiler_params=pltpu.CompilerParams(
            dimension_semantics=("parallel",),
            vmem_limit_bytes=int(vmem_limit_bytes)),
    )(s2, t2, tgt2)

    sums = jnp.sum(partials[:, 0, :3], axis=0)
    kl_sum, ce_sum, cnt = sums[0], sums[1], sums[2]

    # F.kl_div(..., reduction='batchmean') on [B, S, V] divides by B, then *T^2
    distill = (kl_sum / B) * (t_f ** 2)
    # F.cross_entropy mean over non-ignored tokens
    hard = ce_sum / jnp.maximum(cnt, 1.0)
    total = alpha * distill + beta * hard
    return {
        "distillation_loss": distill,
        "hard_target_loss": hard,
        "total_loss": total,
    }


def _reference(student, teacher, targets, temperature, alpha, beta):
    """Plain-JAX reference mirroring the PyTorch semantics."""
    B, S, V = student.shape
    s_s = student / temperature
    t_s = teacher / temperature
    log_ps = jax.nn.log_softmax(s_s, axis=-1)
    p_t = jax.nn.softmax(t_s, axis=-1)
    log_pt = jax.nn.log_softmax(t_s, axis=-1)
    kl = jnp.sum(p_t * (log_pt - log_ps)) / B * temperature ** 2

    logp = jax.nn.log_softmax(student, axis=-1).reshape(-1, V)
    tgt = targets.reshape(-1)
    valid = tgt != -100
    safe = jnp.where(valid, tgt, 0)
    nll = -jnp.take_along_axis(logp, safe[:, None], axis=-1)[:, 0]
    hard = jnp.sum(jnp.where(valid, nll, 0.0)) / jnp.maximum(jnp.sum(valid), 1)
    return kl, hard, alpha * kl + beta * hard


if __name__ == "__main__":
    import numpy as np

    key = jax.random.PRNGKey(0)
    k1, k2, k3, k4, k5, k6 = jax.random.split(key, 6)

    temperature, alpha, beta = 4.0, 0.7, 0.3   # DistillationConfig defaults

    # --- test 1: small single-tile case, f32 logits ---
    B, S, V = 2, 8, 128
    student = jax.random.normal(k1, (B, S, V), dtype=jnp.float32)
    teacher = jax.random.normal(k2, (B, S, V), dtype=jnp.float32)
    targets = jax.random.randint(k3, (B, S), 0, V, dtype=jnp.int32)
    targets = targets.at[0, 0].set(-100).at[1, 3].set(-100)

    losses = distillation_loss(student, teacher, targets,
                               temperature=temperature, alpha=alpha, beta=beta)
    jax.block_until_ready(losses["total_loss"])

    kl_ref, hard_ref, total_ref = _reference(student, teacher, targets,
                                             temperature, alpha, beta)
    np.testing.assert_allclose(np.asarray(losses["distillation_loss"]),
                               np.asarray(kl_ref), rtol=1e-4, atol=1e-4)
    np.testing.assert_allclose(np.asarray(losses["hard_target_loss"]),
                               np.asarray(hard_ref), rtol=1e-4, atol=1e-4)
    np.testing.assert_allclose(np.asarray(losses["total_loss"]),
                               np.asarray(total_ref), rtol=1e-4, atol=1e-4)

    # --- test 2: multi-tile case with row padding (N = 39 -> 48, 3 tiles) ---
    B2, S2, V2 = 3, 13, 256
    student2 = jax.random.normal(k4, (B2, S2, V2), dtype=jnp.float32)
    teacher2 = jax.random.normal(k5, (B2, S2, V2), dtype=jnp.float32)
    targets2 = jax.random.randint(k6, (B2, S2), 0, V2, dtype=jnp.int32)
    targets2 = targets2.at[0, 0].set(-100)

    losses2 = distillation_loss(student2, teacher2, targets2,
                                temperature=temperature, alpha=alpha, beta=beta,
                                row_tile=16)
    jax.block_until_ready(losses2["total_loss"])
    kl_ref2, hard_ref2, total_ref2 = _reference(student2, teacher2, targets2,
                                                temperature, alpha, beta)
    np.testing.assert_allclose(np.asarray(losses2["total_loss"]),
                               np.asarray(total_ref2), rtol=1e-4, atol=1e-4)

    # --- test 3: bf16 storage path (cast to f32 inside the kernel) ---
    losses_bf = distillation_loss(student.astype(jnp.bfloat16),
                                  teacher.astype(jnp.bfloat16), targets,
                                  temperature=temperature, alpha=alpha, beta=beta)
    jax.block_until_ready(losses_bf["total_loss"])
    assert bool(jnp.isfinite(losses_bf["total_loss"]))

    print("KERNEL_OK")
</pallas_src>

<mosaic_0001>
module attributes {stable_mosaic.version = 11 : i64} {
  func.func @_distill_kernel(%arg0: i32, %arg1: memref<16x128xf32, #tpu.memory_space<vmem>>, %arg2: memref<16x128xf32, #tpu.memory_space<vmem>>, %arg3: memref<16x1xi32, #tpu.memory_space<vmem>>, %arg4: memref<1x8x128xf32, #tpu.memory_space<vmem>>) attributes {dimension_semantics = [#tpu.dimension_semantics<parallel>], iteration_bounds = array<i64: 1>, scalar_prefetch = 0 : i64, scratch_operands = 0 : i64, tpu.core_type = #tpu.core_type<tc>, window_params = [{transform_indices = @transform_0, window_bounds = array<i64: 16, 128>}, {transform_indices = @transform_1, window_bounds = array<i64: 16, 128>}, {transform_indices = @transform_2, window_bounds = array<i64: 16, 1>}, {transform_indices = @transform_3, window_bounds = array<i64: 1, 8, 128>}]} {
    %c0 = arith.constant 0 : index
    %c0_0 = arith.constant 0 : index
    %0 = vector.load %arg1[%c0, %c0_0] : memref<16x128xf32, #tpu.memory_space<vmem>>, vector<16x128xf32>
    %c0_1 = arith.constant 0 : index
    %c0_2 = arith.constant 0 : index
    %1 = vector.load %arg2[%c0_1, %c0_2] : memref<16x128xf32, #tpu.memory_space<vmem>>, vector<16x128xf32>
    %c0_3 = arith.constant 0 : index
    %c0_4 = arith.constant 0 : index
    %2 = vector.load %arg3[%c0_3, %c0_4] : memref<16x1xi32, #tpu.memory_space<vmem>>, vector<16x1xi32>
    %cst = arith.constant 2.500000e-01 : f32
    %3 = vector.broadcast %cst : f32 to vector<16x128xf32>
    %4 = arith.mulf %0, %3 : vector<16x128xf32>
    %cst_5 = arith.constant 2.500000e-01 : f32
    %5 = vector.broadcast %cst_5 : f32 to vector<16x128xf32>
    %6 = arith.mulf %1, %5 : vector<16x128xf32>
    %cst_6 = arith.constant dense<0xFF800000> : vector<16xf32>
    %7 = vector.multi_reduction <maximumf>, %4, %cst_6 [1] : vector<16x128xf32> to vector<16xf32>
    %8 = vector.shape_cast %7 : vector<16xf32> to vector<16x1xf32>
    %9 = vector.broadcast %8 : vector<16x1xf32> to vector<16x128xf32>
    %10 = arith.subf %4, %9 : vector<16x128xf32>
    %11 = math.exp %10 : vector<16x128xf32>
    %cst_7 = arith.constant dense<0.000000e+00> : vector<16xf32>
    %12 = vector.multi_reduction <add>, %11, %cst_7 [1] : vector<16x128xf32> to vector<16xf32>
    %13 = vector.shape_cast %12 : vector<16xf32> to vector<16x1xf32>
    %14 = vector.broadcast %8 : vector<16x1xf32> to vector<16x128xf32>
    %15 = arith.subf %4, %14 : vector<16x128xf32>
    %16 = math.log %13 : vector<16x1xf32>
    %17 = vector.broadcast %16 : vector<16x1xf32> to vector<16x128xf32>
    %18 = arith.subf %15, %17 : vector<16x128xf32>
    %cst_8 = arith.constant dense<0xFF800000> : vector<16xf32>
    %19 = vector.multi_reduction <maximumf>, %6, %cst_8 [1] : vector<16x128xf32> to vector<16xf32>
    %20 = vector.shape_cast %19 : vector<16xf32> to vector<16x1xf32>
    %21 = vector.broadcast %20 : vector<16x1xf32> to vector<16x128xf32>
    %22 = arith.subf %6, %21 : vector<16x128xf32>
    %23 = math.exp %22 : vector<16x128xf32>
    %cst_9 = arith.constant dense<0.000000e+00> : vector<16xf32>
    %24 = vector.multi_reduction <add>, %23, %cst_9 [1] : vector<16x128xf32> to vector<16xf32>
    %25 = vector.shape_cast %24 : vector<16xf32> to vector<16x1xf32>
    %cst_10 = arith.constant 1.000000e+00 : f32
    %26 = vector.broadcast %cst_10 : f32 to vector<16x1xf32>
    %27 = arith.divf %26, %25 : vector<16x1xf32>
    %28 = vector.broadcast %27 : vector<16x1xf32> to vector<16x128xf32>
    %29 = arith.mulf %23, %28 : vector<16x128xf32>
    %30 = vector.broadcast %20 : vector<16x1xf32> to vector<16x128xf32>
    %31 = arith.subf %6, %30 : vector<16x128xf32>
    %32 = math.log %25 : vector<16x1xf32>
    %33 = vector.broadcast %32 : vector<16x1xf32> to vector<16x128xf32>
    %34 = arith.subf %31, %33 : vector<16x128xf32>
    %35 = arith.subf %34, %18 : vector<16x128xf32>
    %36 = arith.mulf %29, %35 : vector<16x128xf32>
    %cst_11 = arith.constant dense<0.000000e+00> : vector<16xf32>
    %37 = vector.multi_reduction <add>, %36, %cst_11 [1] : vector<16x128xf32> to vector<16xf32>
    %38 = vector.shape_cast %37 : vector<16xf32> to vector<16x1xf32>
    %cst_12 = arith.constant 4.000000e+00 : f32
    %39 = vector.broadcast %cst_12 : f32 to vector<16x1xf32>
    %40 = arith.mulf %8, %39 : vector<16x1xf32>
    %41 = arith.mulf %11, %11 : vector<16x128xf32>
    %42 = arith.mulf %41, %41 : vector<16x128xf32>
    %cst_13 = arith.constant dense<0.000000e+00> : vector<16xf32>
    %43 = vector.multi_reduction <add>, %42, %cst_13 [1] : vector<16x128xf32> to vector<16xf32>
    %44 = vector.shape_cast %43 : vector<16xf32> to vector<16x1xf32>
    %45 = math.log %44 : vector<16x1xf32>
    %46 = arith.addf %45, %40 : vector<16x1xf32>
    %47 = tpu.iota {dimensions = array<i32: 1>} : vector<16x128xi32>
    %48 = vector.broadcast %2 : vector<16x1xi32> to vector<16x128xi32>
    %49 = arith.cmpi eq, %47, %48 : vector<16x128xi32>
    %cst_14 = arith.constant 0.000000e+00 : f32
    %50 = vector.broadcast %cst_14 : f32 to vector<16x128xf32>
    %51 = arith.select %49, %0, %50 : vector<16x128xi1>, vector<16x128xf32>
    %cst_15 = arith.constant dense<0.000000e+00> : vector<16xf32>
    %52 = vector.multi_reduction <add>, %51, %cst_15 [1] : vector<16x128xf32> to vector<16xf32>
    %53 = vector.shape_cast %52 : vector<16xf32> to vector<16x1xf32>
    %c-100_i32 = arith.constant -100 : i32
    %54 = vector.broadcast %c-100_i32 : i32 to vector<16x1xi32>
    %55 = arith.cmpi ne, %2, %54 : vector<16x1xi32>
    %56 = arith.extui %55 : vector<16x1xi1> to vector<16x1xi32>
    %57 = arith.sitofp %56 : vector<16x1xi32> to vector<16x1xf32>
    %58 = arith.subf %46, %53 : vector<16x1xf32>
    %59 = arith.mulf %58, %57 : vector<16x1xf32>
    %60 = vector.shape_cast %38 : vector<16x1xf32> to vector<1x16x1xf32>
    %cst_16 = arith.constant dense<0.000000e+00> : vector<1xf32>
    %61 = vector.multi_reduction <add>, %60, %cst_16 [1, 2] : vector<1x16x1xf32> to vector<1xf32>
    %62 = vector.shape_cast %61 : vector<1xf32> to vector<1x1x1xf32>
    %63 = vector.extract %62[0, 0, 0] : f32 from vector<1x1x1xf32>
    %64 = vector.shape_cast %59 : vector<16x1xf32> to vector<1x16x1xf32>
    %cst_17 = arith.constant dense<0.000000e+00> : vector<1xf32>
    %65 = vector.multi_reduction <add>, %64, %cst_17 [1, 2] : vector<1x16x1xf32> to vector<1xf32>
    %66 = vector.shape_cast %65 : vector<1xf32> to vector<1x1x1xf32>
    %67 = vector.extract %66[0, 0, 0] : f32 from vector<1x1x1xf32>
    %68 = vector.shape_cast %57 : vector<16x1xf32> to vector<1x16x1xf32>
    %cst_18 = arith.constant dense<0.000000e+00> : vector<1xf32>
    %69 = vector.multi_reduction <add>, %68, %cst_18 [1, 2] : vector<1x16x1xf32> to vector<1xf32>
    %70 = vector.shape_cast %69 : vector<1xf32> to vector<1x1x1xf32>
    %71 = vector.extract %70[0, 0, 0] : f32 from vector<1x1x1xf32>
    %72 = tpu.iota {dimensions = array<i32: 1>} : vector<8x128xi32>
    %73 = tpu.iota {dimensions = array<i32: 0>} : vector<8x128xi32>
    %c0_i32 = arith.constant 0 : i32
    %74 = vector.broadcast %c0_i32 : i32 to vector<8x128xi32>
    %75 = arith.cmpi eq, %73, %74 : vector<8x128xi32>
    %c0_i32_19 = arith.constant 0 : i32
    %76 = vector.broadcast %c0_i32_19 : i32 to vector<8x128xi32>
    %77 = arith.cmpi eq, %72, %76 : vector<8x128xi32>
    %78 = arith.andi %75, %77 : vector<8x128xi1>
    %c1_i32 = arith.constant 1 : i32
    %79 = vector.broadcast %c1_i32 : i32 to vector<8x128xi32>
    %80 = arith.cmpi eq, %72, %79 : vector<8x128xi32>
    %81 = arith.andi %75, %80 : vector<8x128xi1>
    %c2_i32 = arith.constant 2 : i32
    %82 = vector.broadcast %c2_i32 : i32 to vector<8x128xi32>
    %83 = arith.cmpi eq, %72, %82 : vector<8x128xi32>
    %84 = arith.andi %75, %83 : vector<8x128xi1>
    %cst_20 = arith.constant 0.000000e+00 : f32
    %85 = vector.broadcast %71 : f32 to vector<8x128xf32>
    %86 = vector.broadcast %cst_20 : f32 to vector<8x128xf32>
    %87 = arith.select %84, %85, %86 : vector<8x128xi1>, vector<8x128xf32>
    %88 = vector.broadcast %67 : f32 to vector<8x128xf32>
    %89 = arith.select %81, %88, %87 : vector<8x128xi1>, vector<8x128xf32>
    %90 = vector.broadcast %63 : f32 to vector<8x128xf32>
    %91 = arith.select %78, %90, %89 : vector<8x128xi1>, vector<8x128xf32>
    %c0_21 = arith.constant 0 : index
    %c0_22 = arith.constant 0 : index
    %c0_23 = arith.constant 0 : index
    %92 = vector.load %arg4[%c0_21, %c0_22, %c0_23] : memref<1x8x128xf32, #tpu.memory_space<vmem>>, vector<1x8x128xf32>
    %93 = vector.shape_cast %92 : vector<1x8x128xf32> to vector<8x128xf32>
    %94 = vector.shape_cast %91 : vector<8x128xf32> to vector<1x8x128xf32>
    tpu.vector_store %arg4[%c0_21, %c0_22, %c0_23], %94 {strides = array<i32>} : memref<1x8x128xf32, #tpu.memory_space<vmem>>, vector<1x8x128xf32>,
    return
  }
  func.func @transform_0(%arg0: i32) -> (i32, i32) {
    %c0_i32 = arith.constant 0 : i32
    %c0_i32_0 = arith.constant 0 : i32
    return %arg0, %c0_i32 : i32, i32
  }
  func.func @transform_1(%arg0: i32) -> (i32, i32) {
    %c0_i32 = arith.constant 0 : i32
    %c0_i32_0 = arith.constant 0 : i32
    return %arg0, %c0_i32 : i32, i32
  }
  func.func @transform_2(%arg0: i32) -> (i32, i32) {
    %c0_i32 = arith.constant 0 : i32
    %c0_i32_0 = arith.constant 0 : i32
    return %arg0, %c0_i32 : i32, i32
  }
  func.func @transform_3(%arg0: i32) -> (i32, i32, i32) {
    %c0_i32 = arith.constant 0 : i32
    %c0_i32_0 = arith.constant 0 : i32
    %c0_i32_1 = arith.constant 0 : i32
    return %arg0, %c0_i32, %c0_i32_0 : i32, i32, i32
  }
}

</mosaic_0001>

<llo_original>
// kernel: tpu_custom_call.1
$region0: #{tpu_custom_call.1}
  #allocation0 [shape = 'u32[]', space=smem, size = 0x4, offset = 0x4, fixed_abs, tag = 'smem constant byte address 0x4 - core index']
  #allocation1 [shape = 'u32[72,128]{1,0:T(1,128)}', space=vmem, size = 0x9000, scoped, tag = 'internal scratch']
  %s0 = inlined_call_operand.vmem [shape: f32[16,128], index: 0, kind: input, shape index: {}]
  %s1 = inlined_call_operand.hbm [shape: f32[16,128], index: 1, kind: input, shape index: {}]
  %s2 = inlined_call_operand.vmem [shape: s32[16,1], index: 2, kind: input, shape index: {}]
  %s3 = inlined_call_operand.hbm [shape: f32[1,8,128], index: 3, kind: output, shape index: {}]
  %s4 = sld [smem:[#allocation0]]
  $region26: #{tpu_custom_call.1} parent=0
    _
  %s6 = ssub.s32 1, %s4
  %s7 = scalar_select 0, %s6, %s4
  $region1: #{tpu_custom_call.1} parent=0
    #allocation2 [shape = 'u8[8192]{0}', space=vmem, size = 0x2000, scoped, tag = 'input window, operand 1, single buffered']
    #allocation3 [shape = 's32[1]{0}', space=sflag, size = 0x4, scoped, tag = 'scoped memory for tpu_custom_call.1']
    #allocation4 [shape = 's32[1]{0}', space=sflag, size = 0x4, scoped, tag = 'scoped memory for tpu_custom_call.1']
    #allocation5 [shape = 'u8[4096]{0}', space=vmem, size = 0x1000, scoped, tag = 'output window, operand 0, single buffered']
    %8 = vsyncpa [#allocation3], 0
    %9 = vsyncpa [#allocation4], 0
    // Predicated region
    $region2: #{tpu_custom_call.1} parent=1 // pred_check
      _
    $region3: #{tpu_custom_call.1} parent=1 // pred_check_branch
      %11 = sbr.rel (0) target = $region5
    $region4: #{tpu_custom_call.1} parent=1 // pred_region
      _
    $region5: #{tpu_custom_call.1} parent=1 // pred_fallthru
      _
    // Predicated region
    $region6: #{tpu_custom_call.1} parent=1 // pred_check
      _
    $region7: #{tpu_custom_call.1} parent=1 // pred_check_branch
      %13 = sbr.rel (0) target = $region9
    $region8: #{tpu_custom_call.1} parent=1 // pred_region
      %15 = vsyncadd [#allocation3], 0
      %s16 = sshll.u32 %s1, 4
      %s17 = int_to_ptr.hbm [resolvable:$true] %s16
      %s18 = sshll.u32 [#allocation2], 4
      %s19 = int_to_ptr.vmem [resolvable:$true] %s18
      %24 = dma.hbm_to_vmem [thread:$0]  %s17, 256, %s19, [#allocation3], 128, 128, 8
    $region9: #{tpu_custom_call.1} parent=1 // pred_fallthru
      _
    // Predicated region
    $region10: #{tpu_custom_call.1} parent=1 // pred_check
      _
    $region11: #{tpu_custom_call.1} parent=1 // pred_check_branch
      %26 = sbr.rel (0) target = $region13
    $region12: #{tpu_custom_call.1} parent=1 // pred_region
      _
    $region13: #{tpu_custom_call.1} parent=1 // pred_fallthru
      _
    // Predicated region
    $region14: #{tpu_custom_call.1} parent=1 // pred_check
      _
    $region15: #{tpu_custom_call.1} parent=1 // pred_check_branch
      %28 = sbr.rel (0) target = $region17
    $region16: #{tpu_custom_call.1} parent=1 // pred_region
      %30 = dma.done [#allocation3], 256
    $region17: #{tpu_custom_call.1} parent=1 // pred_fallthru
      _
    %v31 = vld [vmem:[%s0] sm:$0xff]
    %v32 = vld [vmem:[%s0 + $0x8] sm:$0xff]
    %v33 = vld [vmem:[#allocation2] sm:$0xff]
    %v34 = vld [vmem:[#allocation2 + $0x8] sm:$0xff]
    %v35 = vld [vmem:[%s2] sm:$0xff]
    %v36 = vld [vmem:[%s2 + $0x8] sm:$0xff]
    %v37 = vmul.f32 %v31, 0.25
    %v38 = vmul.f32 %v32, 0.25
    %v39 = vmul.f32 %v33, 0.25
    %v40 = vmul.f32 %v34, 0.25
    %41 = vmax.xlane.f32.xlu0 %v37
    %v42 = vpop.xlane.xlu0 %41
    %43 = vmax.xlane.f32.xlu0 %v38
    %v44 = vpop.xlane.xlu0 %43
    %v45 = vsub.f32 %v37, %v42
    %v46 = vsub.f32 %v38, %v44
    %v47 = vmul.f32 %v45, 1.442695
    %v48 = vpow.pop %v47
    %v49 = vmul.f32 %v46, 1.442695
    %v50 = vpow.pop %v49
    %51 = vadd.xlane.f32.xlu0 %v48
    %v52 = vpop.xlane.xlu0 %51
    %53 = vadd.xlane.f32.xlu0 %v50
    %v54 = vpop.xlane.xlu0 %53
    %v55 = vlog2.pop %v52
    %v56 = vmul.f32 %v55, 0.6931472
    %v57 = vlog2.pop %v54
    %v58 = vmul.f32 %v57, 0.6931472
    %v59 = vsub.f32 %v45, %v56
    %v60 = vsub.f32 %v46, %v58
    %61 = vmax.xlane.f32.xlu0 %v39
    %v62 = vpop.xlane.xlu0 %61
    %63 = vmax.xlane.f32.xlu0 %v40
    %v64 = vpop.xlane.xlu0 %63
    %v65 = vsub.f32 %v39, %v62
    %v66 = vsub.f32 %v40, %v64
    %v67 = vmul.f32 %v65, 1.442695
    %v68 = vpow.pop %v67
    %v69 = vmul.f32 %v66, 1.442695
    %v70 = vpow.pop %v69
    %71 = vadd.xlane.f32.xlu0 %v68
    %v72 = vpop.xlane.xlu0 %71
    %73 = vadd.xlane.f32.xlu0 %v70
    %v74 = vpop.xlane.xlu0 %73
    %v75 = vrcp.pop %v72
    %v76 = vmul.f32 %v72, %v75
    %v77 = vsub.f32 1.0, %v76
    %v78 = vmul.f32 %v75, %v77
    %v79 = vadd.f32 %v75, %v78
    %vm80 = vweird.f32 %v72
    %vm81 = vweird.f32 %v75
    %vm82 = vmor %vm80, %vm81
    %v83 = vsel %vm82, %v75, %v79
    %v84 = vand.u32 2147483647, %v72
    %vm85 = vcmp.eq.f32.partialorder %v84, 8.507059e+37
    %v86 = vand.u32 %v72, 2147483648
    %v87 = vor.u32 1.1754944e-38, %v86
    %v88 = vsel %vm85, %v87, %v83
    %v89 = vmul.f32 1.0, %v88
    %v90 = vrcp.pop %v74
    %v91 = vmul.f32 %v74, %v90
    %v92 = vsub.f32 1.0, %v91
    %v93 = vmul.f32 %v90, %v92
    %v94 = vadd.f32 %v90, %v93
    %vm95 = vweird.f32 %v74
    %vm96 = vweird.f32 %v90
    %vm97 = vmor %vm95, %vm96
    %v98 = vsel %vm97, %v90, %v94
    %v99 = vand.u32 2147483647, %v74
    %vm100 = vcmp.eq.f32.partialorder %v99, 8.507059e+37
    %v101 = vand.u32 %v74, 2147483648
    %v102 = vor.u32 1.1754944e-38, %v101
    %v103 = vsel %vm100, %v102, %v98
    %v104 = vmul.f32 1.0, %v103
    %v105 = vmul.f32 %v68, %v89
    %v106 = vmul.f32 %v70, %v104
    %v107 = vlog2.pop %v72
    %v108 = vmul.f32 %v107, 0.6931472
    %v109 = vlog2.pop %v74
    %v110 = vmul.f32 %v109, 0.6931472
    %v111 = vsub.f32 %v65, %v108
    %v112 = vsub.f32 %v66, %v110
    %v113 = vsub.f32 %v111, %v59
    %v114 = vsub.f32 %v112, %v60
    %v115 = vmul.f32 %v105, %v113
    %v116 = vmul.f32 %v106, %v114
    %117 = vadd.xlane.f32.xlu0 %v115
    %v118 = vpop.xlane.xlu0 %117
    %119 = vadd.xlane.f32.xlu0 %v116
    %v120 = vpop.xlane.xlu0 %119
    %v121 = vmul.f32 %v42, 4.0
    %v122 = vmul.f32 %v44, 4.0
    %v123 = vmul.f32 %v48, %v48
    %v124 = vmul.f32 %v50, %v50
    %v125 = vmul.f32 %v123, %v123
    %v126 = vmul.f32 %v124, %v124
    %127 = vadd.xlane.f32.xlu0 %v125
    %v128 = vpop.xlane.xlu0 %127
    %129 = vadd.xlane.f32.xlu0 %v126
    %v130 = vpop.xlane.xlu0 %129
    %v131 = vlog2.pop %v128
    %v132 = vmul.f32 %v131, 0.6931472
    %v133 = vlog2.pop %v130
    %v134 = vmul.f32 %v133, 0.6931472
    %v135 = vadd.f32 %v132, %v121
    %v136 = vadd.f32 %v134, %v122
    %v137 = vlaneseq
    %v138 = vand.u32 %v137, 127
    %139 = vset.pattern.permute.xlu0 0
    %140 = vperm.xlu0 %139, %v35
    %v141 = vpop.permute.xlu0 %140
    %142 = vset.pattern.permute.xlu0 0
    %143 = vperm.xlu0 %142, %v36
    %v144 = vpop.permute.xlu0 %143
    %vm145 = vcmp.eq.s32.totalorder %v138, %v141
    %vm146 = vcmp.eq.s32.totalorder %v138, %v144
    %v147 = vsel %vm145, %v31, 0.0
    %v148 = vsel %vm146, %v32, 0.0
    %149 = vadd.xlane.f32.xlu0 %v147
    %v150 = vpop.xlane.xlu0 %149
    %151 = vadd.xlane.f32.xlu0 %v148
    %v152 = vpop.xlane.xlu0 %151
    %vm153 = vcmp.ne.s32.totalorder %v35, 4294967196
    %vm154 = vcmp.ne.s32.totalorder %v36, 4294967196
    %v155 = vsel %vm153, 1, 0
    %v156 = vsel %vm154, 1, 0
    %v157 = vcvt.s32.f32 %v155
    %v158 = vcvt.s32.f32 %v156
    %v159 = vsub.f32 %v135, %v150
    %v160 = vsub.f32 %v136, %v152
    %v161 = vmul.f32 %v159, %v157
    %v162 = vmul.f32 %v160, %v158
    %vm163 = vcmask 7168
    %v164 = vsel %vm163, %v118, 0.0
    %v165 = vsel %vm163, %v120, 0.0
    %v166 = vadd.f32 %v164, %v165
    %167 = vadd.xlane.f32.xlu0 %v166
    %v168 = vpop.xlane.xlu0 %167
    %v169 = vrot.slane %v168, 4
    %v170 = vadd.f32 %v168, %v169
    %v171 = vrot.slane %v170, 2
    %v172 = vadd.f32 %v170, %v171
    %v173 = vrot.slane %v172, 1
    %v174 = vadd.f32 %v172, %v173
    %s175 = vtos %v174
    %v176 = vsel %vm163, %v161, 0.0
    %v177 = vsel %vm163, %v162, 0.0
    %v178 = vadd.f32 %v176, %v177
    %179 = vadd.xlane.f32.xlu0 %v178
    %v180 = vpop.xlane.xlu0 %179
    %v181 = vrot.slane %v180, 4
    %v182 = vadd.f32 %v180, %v181
    %v183 = vrot.slane %v182, 2
    %v184 = vadd.f32 %v182, %v183
    %v185 = vrot.slane %v184, 1
    %v186 = vadd.f32 %v184, %v185
    %s187 = vtos %v186
    %v188 = vsel %vm163, %v157, 0.0
    %v189 = vsel %vm163, %v158, 0.0
    %v190 = vadd.f32 %v188, %v189
    %191 = vadd.xlane.f32.xlu0 %v190
    %v192 = vpop.xlane.xlu0 %191
    %v193 = vrot.slane %v192, 4
    %v194 = vadd.f32 %v192, %v193
    %v195 = vrot.slane %v194, 2
    %v196 = vadd.f32 %v194, %v195
    %v197 = vrot.slane %v196, 1
    %v198 = vadd.f32 %v196, %v197
    %s199 = vtos %v198
    %v200 = vlaneseq
    %v201 = vshrl.u32 %v200, 7
    %vm202 = vcmp.eq.s32.totalorder %v201, 0
    %vm203 = vcmp.eq.s32.totalorder %v138, 0
    %vm204 = vmand %vm202, %vm203
    %vm205 = vcmp.eq.s32.totalorder %v138, 1
    %vm206 = vmand %vm202, %vm205
    %vm207 = vcmp.eq.s32.totalorder %v138, 2
    %vm208 = vmand %vm202, %vm207
    %v209 = vstv %s199
    %v210 = vsel %vm208, %v209, 0.0
    %v211 = vstv %s187
    %v212 = vsel %vm206, %v211, %v210
    %v213 = vstv %s175
    %v214 = vsel %vm204, %v213, %v212
    %215 = vst [vmem:[#allocation5] sm:$0xff] %v214
    // Predicated region
    $region18: #{tpu_custom_call.1} parent=1 // pred_check
      _
    $region19: #{tpu_custom_call.1} parent=1 // pred_check_branch
      %217 = sbr.rel (0) target = $region21
    $region20: #{tpu_custom_call.1} parent=1 // pred_region
      %219 = vsyncadd [#allocation4], 0
      %s221 = sshll.u32 [#allocation5], 4
      %s222 = int_to_ptr.vmem [resolvable:$true] %s221
      %s223 = sshll.u32 %s3, 4
      %s224 = int_to_ptr.hbm [resolvable:$true] %s223
      %226 = dma.vmem_to_hbm [thread:$0]  %s222, 128, %s224, [#allocation4]
    $region21: #{tpu_custom_call.1} parent=1 // pred_fallthru
      _
    // Predicated region
    $region22: #{tpu_custom_call.1} parent=1 // pred_check
      _
    $region23: #{tpu_custom_call.1} parent=1 // pred_check_branch
      %228 = sbr.rel (0) target = $region25
    $region24: #{tpu_custom_call.1} parent=1 // pred_region
      %230 = dma.done [#allocation4], 128
    $region25: #{tpu_custom_call.1} parent=1 // pred_fallthru
      _
    %231 = vsyncpa [#allocation3], 1
    %232 = vsyncpa [#allocation4], 1

</llo_original>
